<compile_context>
chip_gen: v7x
topology: tpu7x:2x2x1
jax: 0.10.0
libtpu: 0.0.40
codegen_flags: <defaults>
</compile_context>

<pallas_src>
import functools
import math

import numpy as np
import jax
import jax.numpy as jnp
from jax import lax
from jax.experimental import pallas as pl
from jax.experimental.pallas import tpu as pltpu

NEG_SLOPE = 0.01  # nn.LeakyReLU default negative_slope


# ---------------------------------------------------------------------------
# Pallas kernel: fused grouped 3x3 conv + bias + LeakyReLU + PixelShuffle
# (all batches at once, B*C rows on sublanes, output pixels on lanes)
# ---------------------------------------------------------------------------
def _fused_conv_lrelu_ps_kernel(shifts, offsets, r, W, rrW,
                                x_ref, wt_ref, bt_ref, o_ref):
    """x_ref:  (Cin_g, R, NP)   r x r nearest-expanded input, R = B*C rows,
                                lane p = final (pixel-shuffled) output pixel.
       wt_ref: (T, Cin_g, R, LW) periodic per-tap weight tiles (period r*r*W | LW)
       bt_ref: (R, LW)           periodic bias tile
       o_ref:  (R, NP)           final output rows (bit-identical to NCHW)"""
    cin_g, R, NP = x_ref.shape
    LW = wt_ref.shape[-1]
    reps = NP // LW

    def lane_tile(a):            # (R, LW) -> (R, NP): cheap 128-lane vreg copies
        return a if reps == 1 else jnp.concatenate([a] * reps, axis=-1)

    # Zero-padding boundary masks, computed once from the lane index (VALU).
    pidx = lax.broadcasted_iota(jnp.int32, (R, NP), 1)
    pm = pidx % (r * W)
    ymask = {-1: pidx >= rrW, 0: None, 1: pidx < NP - rrW}
    xmask = {-1: pm >= r,     0: None, 1: pm < r * W - r}

    acc = lane_tile(bt_ref[...]).astype(jnp.float32)
    for ci in range(cin_g):
        u = x_ref[ci]                                             # (R, NP)
        for t, (oy, ox) in enumerate(offsets):
            s = shifts[t]
            # Bring the input value of tap (oy, ox) to the output lane it feeds.
            shifted = u if s == 0 else pltpu.roll(u, shift=s, axis=1)   # XLU
            term = lane_tile(wt_ref[t, ci]) * shifted                   # VPU FMA
            my, mx = ymask[oy], xmask[ox]
            m = my if mx is None else (mx if my is None else jnp.logical_and(my, mx))
            if m is not None:
                term = jnp.where(m, term, 0.0)    # zero-padding (roll wrap is masked)
            acc = acc + term
    acc = jnp.where(acc > 0, acc, NEG_SLOPE * acc)                # LeakyReLU(0.01)
    o_ref[...] = acc.astype(o_ref.dtype)                          # lane-dense store


# ---------------------------------------------------------------------------
# Weight preprocessing: fold group routing + PixelShuffle into a SMALL periodic
# lane tile (period r*r*W lanes).  Constant-folded under jit.
# ---------------------------------------------------------------------------
def _build_weight_tiles(w_oihw, bias, B, C, r, W, H):
    Cout, Cin_g, KH, KW = w_oihw.shape
    rrW = r * r * W
    NP = H * rrW

    # Smallest lane-tile width that is a whole number of pattern periods,
    # divides NP, and is 128-lane aligned (falls back to full width).
    LW = NP
    for k in range(1, H + 1):
        if H % k == 0 and (k * rrW) % 128 == 0:
            LW = k * rrW
            break

    q = jnp.arange(LW)
    sub = ((q // (r * W)) % r) * r + (q % r)                     # sub-pixel id per lane
    oc = jnp.arange(C)[:, None] * (r * r) + sub[None, :]         # (C, LW) conv out-chan
    # (C, LW, Cin_g, KH, KW) -> (T, Cin_g, C, LW)
    w_taps = jnp.transpose(w_oihw[oc], (3, 4, 2, 0, 1)).reshape(KH * KW, Cin_g, C, LW)
    wt = jnp.broadcast_to(w_taps[:, :, None], (KH * KW, Cin_g, B, C, LW))
    wt = wt.reshape(KH * KW, Cin_g, B * C, LW)                   # rows ordered b*C + c
    bt = jnp.broadcast_to(bias[oc][None], (B, C, LW)).reshape(B * C, LW)

    offsets, shifts = [], []
    for dy in range(KH):
        for dx in range(KW):
            oy, ox = dy - 1, dx - 1
            offsets.append((oy, ox))
            d = oy * rrW + ox * r            # tap displacement in output lanes
            shifts.append(int((-d) % NP))    # np.roll convention: result[p] = u[p + d]
    return wt, bt, tuple(offsets), tuple(shifts), LW


# ---------------------------------------------------------------------------
# One stage: conv(groups) + bias + LeakyReLU + PixelShuffle(r), fused
# ---------------------------------------------------------------------------
def conv_lrelu_ps_pallas(x_nchw, w_oihw, bias, group, r):
    B, Cin, H, W = x_nchw.shape
    Cout, Cin_g, KH, KW = w_oihw.shape
    assert Cin % group == 0 and Cin_g == Cin // group and Cout == r * r * Cin
    C = Cin                        # channels after PixelShuffle
    R = B * C                      # sublane rows (8 here -> full vregs)
    NP = r * r * H * W             # lane axis = final output pixels (1024 here)
    rrW = r * r * W
    T = KH * KW

    wt, bt, offsets, shifts, LW = _build_weight_tiles(w_oihw, bias, B, C, r, W, H)

    # r x r nearest expansion of the input into the *output* lane order, so every
    # conv tap becomes a pure lane roll in-kernel.  One XLA broadcast+reshape,
    # marked fusible into the pallas call (allow_input_fusion) so it can ride the
    # kernel's input DMA instead of its own launch + HBM roundtrip.
    # TODO(synk): do this replication fully in-kernel once a cheap lane-interleave
    # primitive is available (a roll/select ladder or lane gather is not worth it).
    xe = jnp.broadcast_to(x_nchw[:, :, :, None, :, None],
                          (B, Cin, H, r, W, r)).reshape(B, Cin, NP)
    if Cin_g == 1:
        xg = xe.reshape(1, R, NP)          # group routing is the identity: no gather
    else:
        # TODO(synk): at real channel counts (Cin_g ~ 16) switch to per-group
        # im2col MXU matmuls instead of this input-duplicating gather + tap loop.
        base = (jnp.arange(C) // Cin_g) * Cin_g
        chan = base[None, :] + jnp.arange(Cin_g)[:, None]          # (Cin_g, C)
        xg = jnp.transpose(xe[:, chan, :], (1, 0, 2, 3)).reshape(Cin_g, R, NP)

    kernel = functools.partial(_fused_conv_lrelu_ps_kernel, shifts, offsets, r, W, rrW)

    cost = pl.CostEstimate(
        flops=2 * Cin_g * T * R * NP,
        transcendentals=0,
        bytes_accessed=4 * (Cin_g * R * NP + T * Cin_g * R * LW + R * LW + R * NP),
    )

    out = pl.pallas_call(
        kernel,
        out_shape=jax.ShapeDtypeStruct((R, NP), x_nchw.dtype),
        grid=(1,),   # single fat step: per-step overhead dominates at this size.
        # TODO(synk): at production H*W add a spatial row-tile grid axis with a
        # one-output-row halo + per-tile masks, and set vmem_limit_bytes for v7x.
        in_specs=[
            pl.BlockSpec((Cin_g, R, NP), lambda i: (0, 0, 0)),
            pl.BlockSpec((T, Cin_g, R, LW), lambda i: (0, 0, 0, 0)),
            pl.BlockSpec((R, LW), lambda i: (0, 0)),
        ],
        out_specs=pl.BlockSpec((R, NP), lambda i: (0, 0)),
        compiler_params=pltpu.CompilerParams(
            dimension_semantics=("arbitrary",),
            allow_input_fusion=[True, False, False],
        ),
        cost_estimate=cost,
    )(xg, wt, bt)

    # (R, NP) is bit-identical to NCHW (B, C, rH, rW): free reshape, no transpose.
    return out.reshape(B, C, r * H, r * W)


# ---------------------------------------------------------------------------
# Parameters (deterministic; mimics xavier_normal_ weights + default bias init)
# ---------------------------------------------------------------------------
def make_params(key, n_channels, scale, group):
    if scale in (2, 4, 8):
        stages = [(2, 4 * n_channels)] * int(math.log(scale, 2))
    elif scale == 3:
        stages = [(3, 9 * n_channels)]
    else:
        raise ValueError("unsupported scale")
    params = []
    cin = n_channels
    for (r, cout) in stages:
        key, kw, kb = jax.random.split(key, 3)
        cin_g = cin // group
        fan_in, fan_out = cin_g * 9, cout * 9
        std = math.sqrt(2.0 / (fan_in + fan_out))              # xavier_normal_
        w_oihw = std * jax.random.normal(kw, (cout, cin_g, 3, 3), jnp.float32)
        bound = 1.0 / math.sqrt(fan_in)                        # default Conv2d bias init
        b = jax.random.uniform(kb, (cout,), jnp.float32, -bound, bound)
        params.append((r, w_oihw, b))
        cin = cout // (r * r)
    return params


# ---------------------------------------------------------------------------
# Full forward (NCHW in, NCHW out — matches the PyTorch module)
# ---------------------------------------------------------------------------
def upsample_block_pallas(x_nchw, params, group):
    x = x_nchw
    for (r, w_oihw, b) in params:
        x = conv_lrelu_ps_pallas(x, w_oihw, b, group, r)
    return x


# Pure-JAX reference for correctness checking
def upsample_block_ref(x_nchw, params, group):
    x = x_nchw
    for (r, w_oihw, b) in params:
        y = lax.conv_general_dilated(
            x, w_oihw, window_strides=(1, 1), padding=((1, 1), (1, 1)),
            dimension_numbers=('NCHW', 'OIHW', 'NCHW'),
            feature_group_count=group, precision=lax.Precision.HIGHEST)
        y = y + b[None, :, None, None]
        y = jnp.where(y > 0, y, NEG_SLOPE * y)
        B, Crr, H, W = y.shape
        C = Crr // (r * r)
        y = y.reshape(B, C, r, r, H, W)
        y = jnp.transpose(y, (0, 1, 4, 2, 5, 3))
        x = y.reshape(B, C, H * r, W * r)
    return x


if __name__ == "__main__":
    key = jax.random.PRNGKey(0)
    n_channels, scale = 4, 2
    group = 4  # UpsampleBlock hard-codes group=4 for its inner _UpsampleBlock
    B, H, W = 2, 16, 16

    key, kx = jax.random.split(key)
    x = jax.random.normal(kx, (B, n_channels, H, W), jnp.float32)
    params = make_params(key, n_channels, scale, group)

    fwd = jax.jit(lambda inp: upsample_block_pallas(inp, params, group))
    out = jax.block_until_ready(fwd(x))

    assert out.shape == (B, n_channels, H * scale, W * scale), out.shape
    ref = upsample_block_ref(x, params, group)
    np.testing.assert_allclose(np.asarray(out), np.asarray(ref),
                               rtol=1e-3, atol=1e-3)
    print("KERNEL_OK")
</pallas_src>

<mosaic_0001>
module attributes {stable_mosaic.version = 11 : i64} {
  func.func @_fused_conv_lrelu_ps_kernel(%arg0: i32, %arg1: memref<1x8x1024xf32, #tpu.memory_space<vmem>>, %arg2: memref<9x1x8x128xf32, #tpu.memory_space<vmem>>, %arg3: memref<8x128xf32, #tpu.memory_space<vmem>>, %arg4: memref<8x1024xf32, #tpu.memory_space<vmem>>) attributes {dimension_semantics = [#tpu.dimension_semantics<arbitrary>], iteration_bounds = array<i64: 1>, scalar_prefetch = 0 : i64, scratch_operands = 0 : i64, tpu.core_type = #tpu.core_type<tc>, window_params = [{pipeline_mode = #tpu.pipeline_mode<synchronous>, transform_indices = @transform_0, window_bounds = array<i64: 1, 8, 1024>}, {pipeline_mode = #tpu.pipeline_mode<synchronous>, transform_indices = @transform_1, window_bounds = array<i64: 9, 1, 8, 128>}, {pipeline_mode = #tpu.pipeline_mode<synchronous>, transform_indices = @transform_2, window_bounds = array<i64: 8, 128>}, {pipeline_mode = #tpu.pipeline_mode<synchronous>, transform_indices = @transform_3, window_bounds = array<i64: 8, 1024>}]} {
    %0 = tpu.iota {dimensions = array<i32: 1>} : vector<8x1024xi32>
    %c32_i32 = arith.constant 32 : i32
    %c0_i32 = arith.constant 0 : i32
    %1 = arith.cmpi eq, %c32_i32, %c0_i32 : i32
    %c1_i32 = arith.constant 1 : i32
    %2 = arith.select %1, %c1_i32, %c32_i32 : i32
    %3 = vector.broadcast %2 : i32 to vector<8x1024xi32>
    %4 = arith.remsi %0, %3 : vector<8x1024xi32>
    %c0_i32_0 = arith.constant 0 : i32
    %5 = vector.broadcast %c0_i32_0 : i32 to vector<8x1024xi32>
    %6 = arith.cmpi ne, %4, %5 : vector<8x1024xi32>
    %c0_i32_1 = arith.constant 0 : i32
    %7 = vector.broadcast %c0_i32_1 : i32 to vector<8x1024xi32>
    %8 = arith.cmpi slt, %4, %7 : vector<8x1024xi32>
    %c0_i32_2 = arith.constant 0 : i32
    %9 = arith.cmpi slt, %2, %c0_i32_2 : i32
    %10 = vector.broadcast %9 : i1 to vector<8x1024xi1>
    %11 = vector.broadcast %10 : vector<8x1024xi1> to vector<8x1024xi1>
    %12 = arith.xori %8, %11 : vector<8x1024xi1>
    %13 = arith.andi %12, %6 : vector<8x1024xi1>
    %14 = vector.broadcast %2 : i32 to vector<8x1024xi32>
    %15 = arith.addi %4, %14 : vector<8x1024xi32>
    %16 = arith.select %13, %15, %4 : vector<8x1024xi1>, vector<8x1024xi32>
    %c64_i32 = arith.constant 64 : i32
    %17 = vector.broadcast %c64_i32 : i32 to vector<8x1024xi32>
    %18 = arith.cmpi sge, %0, %17 : vector<8x1024xi32>
    %c960_i32 = arith.constant 960 : i32
    %19 = vector.broadcast %c960_i32 : i32 to vector<8x1024xi32>
    %20 = arith.cmpi slt, %0, %19 : vector<8x1024xi32>
    %c2_i32 = arith.constant 2 : i32
    %21 = vector.broadcast %c2_i32 : i32 to vector<8x1024xi32>
    %22 = arith.cmpi sge, %16, %21 : vector<8x1024xi32>
    %c30_i32 = arith.constant 30 : i32
    %23 = vector.broadcast %c30_i32 : i32 to vector<8x1024xi32>
    %24 = arith.cmpi slt, %16, %23 : vector<8x1024xi32>
    %c0 = arith.constant 0 : index
    %c0_3 = arith.constant 0 : index
    %25 = vector.load %arg3[%c0, %c0_3] : memref<8x128xf32, #tpu.memory_space<vmem>>, vector<8x128xf32>
    %26 = tpu.concatenate %25, %25, %25, %25, %25, %25, %25, %25 in 1 : vector<8x128xf32>, vector<8x128xf32>, vector<8x128xf32>, vector<8x128xf32>, vector<8x128xf32>, vector<8x128xf32>, vector<8x128xf32>, vector<8x128xf32> -> vector<8x1024xf32>
    %c0_4 = arith.constant 0 : index
    %c0_5 = arith.constant 0 : index
    %c0_6 = arith.constant 0 : index
    %27 = vector.load %arg1[%c0_4, %c0_5, %c0_6] : memref<1x8x1024xf32, #tpu.memory_space<vmem>>, vector<1x8x1024xf32>
    %28 = vector.shape_cast %27 : vector<1x8x1024xf32> to vector<8x1024xf32>
    %c66_i32 = arith.constant 66 : i32
    %29 = tpu.dynamic_rotate %28 by %c66_i32 dim 1 : vector<8x1024xf32>, i32 -> vector<8x1024xf32>
    %c0_7 = arith.constant 0 : index
    %c0_8 = arith.constant 0 : index
    %c0_9 = arith.constant 0 : index
    %c0_10 = arith.constant 0 : index
    %30 = vector.load %arg2[%c0_7, %c0_8, %c0_9, %c0_10] : memref<9x1x8x128xf32, #tpu.memory_space<vmem>>, vector<1x1x8x128xf32>
    %31 = vector.shape_cast %30 : vector<1x1x8x128xf32> to vector<8x128xf32>
    %32 = tpu.concatenate %31, %31, %31, %31, %31, %31, %31, %31 in 1 : vector<8x128xf32>, vector<8x128xf32>, vector<8x128xf32>, vector<8x128xf32>, vector<8x128xf32>, vector<8x128xf32>, vector<8x128xf32>, vector<8x128xf32> -> vector<8x1024xf32>
    %33 = arith.mulf %32, %29 : vector<8x1024xf32>
    %34 = arith.andi %18, %22 : vector<8x1024xi1>
    %cst = arith.constant 0.000000e+00 : f32
    %35 = vector.broadcast %cst : f32 to vector<8x1024xf32>
    %36 = arith.select %34, %33, %35 : vector<8x1024xi1>, vector<8x1024xf32>
    %37 = arith.addf %26, %36 : vector<8x1024xf32>
    %c64_i32_11 = arith.constant 64 : i32
    %38 = tpu.dynamic_rotate %28 by %c64_i32_11 dim 1 : vector<8x1024xf32>, i32 -> vector<8x1024xf32>
    %c1 = arith.constant 1 : index
    %c0_12 = arith.constant 0 : index
    %c0_13 = arith.constant 0 : index
    %c0_14 = arith.constant 0 : index
    %39 = vector.load %arg2[%c1, %c0_12, %c0_13, %c0_14] : memref<9x1x8x128xf32, #tpu.memory_space<vmem>>, vector<1x1x8x128xf32>
    %40 = vector.shape_cast %39 : vector<1x1x8x128xf32> to vector<8x128xf32>
    %41 = tpu.concatenate %40, %40, %40, %40, %40, %40, %40, %40 in 1 : vector<8x128xf32>, vector<8x128xf32>, vector<8x128xf32>, vector<8x128xf32>, vector<8x128xf32>, vector<8x128xf32>, vector<8x128xf32>, vector<8x128xf32> -> vector<8x1024xf32>
    %42 = arith.mulf %41, %38 : vector<8x1024xf32>
    %cst_15 = arith.constant 0.000000e+00 : f32
    %43 = vector.broadcast %cst_15 : f32 to vector<8x1024xf32>
    %44 = arith.select %18, %42, %43 : vector<8x1024xi1>, vector<8x1024xf32>
    %45 = arith.addf %37, %44 : vector<8x1024xf32>
    %c62_i32 = arith.constant 62 : i32
    %46 = tpu.dynamic_rotate %28 by %c62_i32 dim 1 : vector<8x1024xf32>, i32 -> vector<8x1024xf32>
    %c2 = arith.constant 2 : index
    %c0_16 = arith.constant 0 : index
    %c0_17 = arith.constant 0 : index
    %c0_18 = arith.constant 0 : index
    %47 = vector.load %arg2[%c2, %c0_16, %c0_17, %c0_18] : memref<9x1x8x128xf32, #tpu.memory_space<vmem>>, vector<1x1x8x128xf32>
    %48 = vector.shape_cast %47 : vector<1x1x8x128xf32> to vector<8x128xf32>
    %49 = tpu.concatenate %48, %48, %48, %48, %48, %48, %48, %48 in 1 : vector<8x128xf32>, vector<8x128xf32>, vector<8x128xf32>, vector<8x128xf32>, vector<8x128xf32>, vector<8x128xf32>, vector<8x128xf32>, vector<8x128xf32> -> vector<8x1024xf32>
    %50 = arith.mulf %49, %46 : vector<8x1024xf32>
    %51 = arith.andi %18, %24 : vector<8x1024xi1>
    %cst_19 = arith.constant 0.000000e+00 : f32
    %52 = vector.broadcast %cst_19 : f32 to vector<8x1024xf32>
    %53 = arith.select %51, %50, %52 : vector<8x1024xi1>, vector<8x1024xf32>
    %54 = arith.addf %45, %53 : vector<8x1024xf32>
    %c2_i32_20 = arith.constant 2 : i32
    %55 = tpu.dynamic_rotate %28 by %c2_i32_20 dim 1 : vector<8x1024xf32>, i32 -> vector<8x1024xf32>
    %c3 = arith.constant 3 : index
    %c0_21 = arith.constant 0 : index
    %c0_22 = arith.constant 0 : index
    %c0_23 = arith.constant 0 : index
    %56 = vector.load %arg2[%c3, %c0_21, %c0_22, %c0_23] : memref<9x1x8x128xf32, #tpu.memory_space<vmem>>, vector<1x1x8x128xf32>
    %57 = vector.shape_cast %56 : vector<1x1x8x128xf32> to vector<8x128xf32>
    %58 = tpu.concatenate %57, %57, %57, %57, %57, %57, %57, %57 in 1 : vector<8x128xf32>, vector<8x128xf32>, vector<8x128xf32>, vector<8x128xf32>, vector<8x128xf32>, vector<8x128xf32>, vector<8x128xf32>, vector<8x128xf32> -> vector<8x1024xf32>
    %59 = arith.mulf %58, %55 : vector<8x1024xf32>
    %cst_24 = arith.constant 0.000000e+00 : f32
    %60 = vector.broadcast %cst_24 : f32 to vector<8x1024xf32>
    %61 = arith.select %22, %59, %60 : vector<8x1024xi1>, vector<8x1024xf32>
    %62 = arith.addf %54, %61 : vector<8x1024xf32>
    %c4 = arith.constant 4 : index
    %c0_25 = arith.constant 0 : index
    %c0_26 = arith.constant 0 : index
    %c0_27 = arith.constant 0 : index
    %63 = vector.load %arg2[%c4, %c0_25, %c0_26, %c0_27] : memref<9x1x8x128xf32, #tpu.memory_space<vmem>>, vector<1x1x8x128xf32>
    %64 = vector.shape_cast %63 : vector<1x1x8x128xf32> to vector<8x128xf32>
    %65 = tpu.concatenate %64, %64, %64, %64, %64, %64, %64, %64 in 1 : vector<8x128xf32>, vector<8x128xf32>, vector<8x128xf32>, vector<8x128xf32>, vector<8x128xf32>, vector<8x128xf32>, vector<8x128xf32>, vector<8x128xf32> -> vector<8x1024xf32>
    %66 = arith.mulf %65, %28 : vector<8x1024xf32>
    %67 = arith.addf %62, %66 : vector<8x1024xf32>
    %c1022_i32 = arith.constant 1022 : i32
    %68 = tpu.dynamic_rotate %28 by %c1022_i32 dim 1 : vector<8x1024xf32>, i32 -> vector<8x1024xf32>
    %c5 = arith.constant 5 : index
    %c0_28 = arith.constant 0 : index
    %c0_29 = arith.constant 0 : index
    %c0_30 = arith.constant 0 : index
    %69 = vector.load %arg2[%c5, %c0_28, %c0_29, %c0_30] : memref<9x1x8x128xf32, #tpu.memory_space<vmem>>, vector<1x1x8x128xf32>
    %70 = vector.shape_cast %69 : vector<1x1x8x128xf32> to vector<8x128xf32>
    %71 = tpu.concatenate %70, %70, %70, %70, %70, %70, %70, %70 in 1 : vector<8x128xf32>, vector<8x128xf32>, vector<8x128xf32>, vector<8x128xf32>, vector<8x128xf32>, vector<8x128xf32>, vector<8x128xf32>, vector<8x128xf32> -> vector<8x1024xf32>
    %72 = arith.mulf %71, %68 : vector<8x1024xf32>
    %cst_31 = arith.constant 0.000000e+00 : f32
    %73 = vector.broadcast %cst_31 : f32 to vector<8x1024xf32>
    %74 = arith.select %24, %72, %73 : vector<8x1024xi1>, vector<8x1024xf32>
    %75 = arith.addf %67, %74 : vector<8x1024xf32>
    %c962_i32 = arith.constant 962 : i32
    %76 = tpu.dynamic_rotate %28 by %c962_i32 dim 1 : vector<8x1024xf32>, i32 -> vector<8x1024xf32>
    %c6 = arith.constant 6 : index
    %c0_32 = arith.constant 0 : index
    %c0_33 = arith.constant 0 : index
    %c0_34 = arith.constant 0 : index
    %77 = vector.load %arg2[%c6, %c0_32, %c0_33, %c0_34] : memref<9x1x8x128xf32, #tpu.memory_space<vmem>>, vector<1x1x8x128xf32>
    %78 = vector.shape_cast %77 : vector<1x1x8x128xf32> to vector<8x128xf32>
    %79 = tpu.concatenate %78, %78, %78, %78, %78, %78, %78, %78 in 1 : vector<8x128xf32>, vector<8x128xf32>, vector<8x128xf32>, vector<8x128xf32>, vector<8x128xf32>, vector<8x128xf32>, vector<8x128xf32>, vector<8x128xf32> -> vector<8x1024xf32>
    %80 = arith.mulf %79, %76 : vector<8x1024xf32>
    %81 = arith.andi %20, %22 : vector<8x1024xi1>
    %cst_35 = arith.constant 0.000000e+00 : f32
    %82 = vector.broadcast %cst_35 : f32 to vector<8x1024xf32>
    %83 = arith.select %81, %80, %82 : vector<8x1024xi1>, vector<8x1024xf32>
    %84 = arith.addf %75, %83 : vector<8x1024xf32>
    %c960_i32_36 = arith.constant 960 : i32
    %85 = tpu.dynamic_rotate %28 by %c960_i32_36 dim 1 : vector<8x1024xf32>, i32 -> vector<8x1024xf32>
    %c7 = arith.constant 7 : index
    %c0_37 = arith.constant 0 : index
    %c0_38 = arith.constant 0 : index
    %c0_39 = arith.constant 0 : index
    %86 = vector.load %arg2[%c7, %c0_37, %c0_38, %c0_39] : memref<9x1x8x128xf32, #tpu.memory_space<vmem>>, vector<1x1x8x128xf32>
    %87 = vector.shape_cast %86 : vector<1x1x8x128xf32> to vector<8x128xf32>
    %88 = tpu.concatenate %87, %87, %87, %87, %87, %87, %87, %87 in 1 : vector<8x128xf32>, vector<8x128xf32>, vector<8x128xf32>, vector<8x128xf32>, vector<8x128xf32>, vector<8x128xf32>, vector<8x128xf32>, vector<8x128xf32> -> vector<8x1024xf32>
    %89 = arith.mulf %88, %85 : vector<8x1024xf32>
    %cst_40 = arith.constant 0.000000e+00 : f32
    %90 = vector.broadcast %cst_40 : f32 to vector<8x1024xf32>
    %91 = arith.select %20, %89, %90 : vector<8x1024xi1>, vector<8x1024xf32>
    %92 = arith.addf %84, %91 : vector<8x1024xf32>
    %c958_i32 = arith.constant 958 : i32
    %93 = tpu.dynamic_rotate %28 by %c958_i32 dim 1 : vector<8x1024xf32>, i32 -> vector<8x1024xf32>
    %c8 = arith.constant 8 : index
    %c0_41 = arith.constant 0 : index
    %c0_42 = arith.constant 0 : index
    %c0_43 = arith.constant 0 : index
    %94 = vector.load %arg2[%c8, %c0_41, %c0_42, %c0_43] : memref<9x1x8x128xf32, #tpu.memory_space<vmem>>, vector<1x1x8x128xf32>
    %95 = vector.shape_cast %94 : vector<1x1x8x128xf32> to vector<8x128xf32>
    %96 = tpu.concatenate %95, %95, %95, %95, %95, %95, %95, %95 in 1 : vector<8x128xf32>, vector<8x128xf32>, vector<8x128xf32>, vector<8x128xf32>, vector<8x128xf32>, vector<8x128xf32>, vector<8x128xf32>, vector<8x128xf32> -> vector<8x1024xf32>
    %97 = arith.mulf %96, %93 : vector<8x1024xf32>
    %98 = arith.andi %20, %24 : vector<8x1024xi1>
    %cst_44 = arith.constant 0.000000e+00 : f32
    %99 = vector.broadcast %cst_44 : f32 to vector<8x1024xf32>
    %100 = arith.select %98, %97, %99 : vector<8x1024xi1>, vector<8x1024xf32>
    %101 = arith.addf %92, %100 : vector<8x1024xf32>
    %cst_45 = arith.constant 0.000000e+00 : f32
    %102 = vector.broadcast %cst_45 : f32 to vector<8x1024xf32>
    %103 = arith.cmpf ogt, %101, %102 : vector<8x1024xf32>
    %cst_46 = arith.constant 0.00999999977 : f32
    %104 = vector.broadcast %cst_46 : f32 to vector<8x1024xf32>
    %105 = arith.mulf %104, %101 : vector<8x1024xf32>
    %106 = arith.select %103, %101, %105 : vector<8x1024xi1>, vector<8x1024xf32>
    %c0_47 = arith.constant 0 : index
    %c0_48 = arith.constant 0 : index
    %107 = vector.load %arg4[%c0_47, %c0_48] : memref<8x1024xf32, #tpu.memory_space<vmem>>, vector<8x1024xf32>
    tpu.vector_store %arg4[%c0_47, %c0_48], %106 {strides = array<i32>} : memref<8x1024xf32, #tpu.memory_space<vmem>>, vector<8x1024xf32>,
    return
  }
  func.func @transform_0(%arg0: i32) -> (i32, i32, i32) {
    %c0_i32 = arith.constant 0 : i32
    %c0_i32_0 = arith.constant 0 : i32
    %c0_i32_1 = arith.constant 0 : i32
    %c0_i32_2 = arith.constant 0 : i32
    return %c0_i32, %c0_i32_0, %c0_i32_1 : i32, i32, i32
  }
  func.func @transform_1(%arg0: i32) -> (i32, i32, i32, i32) {
    %c0_i32 = arith.constant 0 : i32
    %c0_i32_0 = arith.constant 0 : i32
    %c0_i32_1 = arith.constant 0 : i32
    %c0_i32_2 = arith.constant 0 : i32
    %c0_i32_3 = arith.constant 0 : i32
    return %c0_i32, %c0_i32_0, %c0_i32_1, %c0_i32_2 : i32, i32, i32, i32
  }
  func.func @transform_2(%arg0: i32) -> (i32, i32) {
    %c0_i32 = arith.constant 0 : i32
    %c0_i32_0 = arith.constant 0 : i32
    %c0_i32_1 = arith.constant 0 : i32
    return %c0_i32, %c0_i32_0 : i32, i32
  }
  func.func @transform_3(%arg0: i32) -> (i32, i32) {
    %c0_i32 = arith.constant 0 : i32
    %c0_i32_0 = arith.constant 0 : i32
    %c0_i32_1 = arith.constant 0 : i32
    return %c0_i32, %c0_i32_0 : i32, i32
  }
}

</mosaic_0001>

<llo_original>
// kernel: _lambda_.1
$region0: #{_lambda_.1}
  #allocation0 [shape = 'u32[]', space=smem, size = 0x4, offset = 0x4, fixed_abs, tag = 'smem constant byte address 0x4 - core index']
  #allocation1 [shape = 'u32[144,128]{1,0:T(1,128)}', space=vmem, size = 0x12000, scoped, tag = 'internal scratch']
  %s0 = inlined_call_operand.vmem [shape: f32[1,8,1024], index: 0, kind: input, shape index: {}]
  %s1 = inlined_call_operand.vmem [shape: f32[9,1,8,128], index: 1, kind: input, shape index: {}]
  %s2 = inlined_call_operand.vmem [shape: f32[8,128], index: 2, kind: input, shape index: {}]
  %s3 = inlined_call_operand.vmem [shape: f32[8,1024], index: 3, kind: output, shape index: {}]
  %s4 = sld [smem:[#allocation0]]
  $region22: #{_lambda_.1} parent=0
    _
  %s6 = ssub.s32 1, %s4
  %s7 = scalar_select 0, %s6, %s4
  // Predicated region
  $region2: #{_lambda_.1} parent=0 // pred_check
    _
  $region3: #{_lambda_.1} parent=0 // pred_check_branch
    %9 = sbr.rel (0) target = $region5
  $region4: #{_lambda_.1} parent=0 // pred_region
    _
  $region5: #{_lambda_.1} parent=0 // pred_fallthru
    _
  // Predicated region
  $region6: #{_lambda_.1} parent=0 // pred_check
    _
  $region7: #{_lambda_.1} parent=0 // pred_check_branch
    %11 = sbr.rel (0) target = $region9
  $region8: #{_lambda_.1} parent=0 // pred_region
    _
  $region9: #{_lambda_.1} parent=0 // pred_fallthru
    _
  // Predicated region
  $region10: #{_lambda_.1} parent=0 // pred_check
    _
  $region11: #{_lambda_.1} parent=0 // pred_check_branch
    %13 = sbr.rel (0) target = $region13
  $region12: #{_lambda_.1} parent=0 // pred_region
    _
  $region13: #{_lambda_.1} parent=0 // pred_fallthru
    _
  %v14 = vlaneseq
  %v15 = vand.u32 %v14, 127
  %v16 = vadd.s32 %v15, 128
  %v17 = vadd.s32 %v15, 256
  %v18 = vadd.s32 %v15, 384
  %v19 = vadd.s32 %v15, 512
  %v20 = vadd.s32 %v15, 640
  %v21 = vadd.s32 %v15, 768
  %v22 = vadd.s32 %v15, 896
  %vm23 = vcmp.lt.s32.totalorder %v15, 0
  %v24 = vsub.s32 0, %v15
  %v25 = vsel %vm23, %v24, %v15
  %v26 = vshrl.u32 %v25, 5
  %v27 = vand.u32 %v25, 31
  %v28 = vsub.s32 0, %v27
  %v29 = vsel %vm23, %v28, %v27
  %vm30 = vcmp.lt.s32.totalorder %v16, 0
  %v31 = vsub.s32 0, %v16
  %v32 = vsel %vm30, %v31, %v16
  %v33 = vshrl.u32 %v32, 5
  %v34 = vand.u32 %v32, 31
  %v35 = vsub.s32 0, %v34
  %v36 = vsel %vm30, %v35, %v34
  %vm37 = vcmp.lt.s32.totalorder %v17, 0
  %v38 = vsub.s32 0, %v17
  %v39 = vsel %vm37, %v38, %v17
  %v40 = vshrl.u32 %v39, 5
  %v41 = vand.u32 %v39, 31
  %v42 = vsub.s32 0, %v41
  %v43 = vsel %vm37, %v42, %v41
  %vm44 = vcmp.lt.s32.totalorder %v18, 0
  %v45 = vsub.s32 0, %v18
  %v46 = vsel %vm44, %v45, %v18
  %v47 = vshrl.u32 %v46, 5
  %v48 = vand.u32 %v46, 31
  %v49 = vsub.s32 0, %v48
  %v50 = vsel %vm44, %v49, %v48
  %vm51 = vcmp.lt.s32.totalorder %v19, 0
  %v52 = vsub.s32 0, %v19
  %v53 = vsel %vm51, %v52, %v19
  %v54 = vshrl.u32 %v53, 5
  %v55 = vand.u32 %v53, 31
  %v56 = vsub.s32 0, %v55
  %v57 = vsel %vm51, %v56, %v55
  %vm58 = vcmp.lt.s32.totalorder %v20, 0
  %v59 = vsub.s32 0, %v20
  %v60 = vsel %vm58, %v59, %v20
  %v61 = vshrl.u32 %v60, 5
  %v62 = vand.u32 %v60, 31
  %v63 = vsub.s32 0, %v62
  %v64 = vsel %vm58, %v63, %v62
  %vm65 = vcmp.lt.s32.totalorder %v21, 0
  %v66 = vsub.s32 0, %v21
  %v67 = vsel %vm65, %v66, %v21
  %v68 = vshrl.u32 %v67, 5
  %v69 = vand.u32 %v67, 31
  %v70 = vsub.s32 0, %v69
  %v71 = vsel %vm65, %v70, %v69
  %vm72 = vcmp.lt.s32.totalorder %v22, 0
  %v73 = vsub.s32 0, %v22
  %v74 = vsel %vm72, %v73, %v22
  %v75 = vshrl.u32 %v74, 5
  %v76 = vand.u32 %v74, 31
  %v77 = vsub.s32 0, %v76
  %v78 = vsel %vm72, %v77, %v76
  %vm79 = vcmp.ne.s32.totalorder %v29, 0
  %vm80 = vcmp.ne.s32.totalorder %v36, 0
  %vm81 = vcmp.ne.s32.totalorder %v43, 0
  %vm82 = vcmp.ne.s32.totalorder %v50, 0
  %vm83 = vcmp.ne.s32.totalorder %v57, 0
  %vm84 = vcmp.ne.s32.totalorder %v64, 0
  %vm85 = vcmp.ne.s32.totalorder %v71, 0
  %vm86 = vcmp.ne.s32.totalorder %v78, 0
  %vm87 = vcmp.lt.s32.totalorder %v29, 0
  %vm88 = vcmp.lt.s32.totalorder %v36, 0
  %vm89 = vcmp.lt.s32.totalorder %v43, 0
  %vm90 = vcmp.lt.s32.totalorder %v50, 0
  %vm91 = vcmp.lt.s32.totalorder %v57, 0
  %vm92 = vcmp.lt.s32.totalorder %v64, 0
  %vm93 = vcmp.lt.s32.totalorder %v71, 0
  %vm94 = vcmp.lt.s32.totalorder %v78, 0
  %vm95 = vmand %vm87, %vm79
  %vm96 = vmand %vm88, %vm80
  %vm97 = vmand %vm89, %vm81
  %vm98 = vmand %vm90, %vm82
  %vm99 = vmand %vm91, %vm83
  %vm100 = vmand %vm92, %vm84
  %vm101 = vmand %vm93, %vm85
  %vm102 = vmand %vm94, %vm86
  %v103 = vadd.s32 %v29, 32
  %v104 = vadd.s32 %v36, 32
  %v105 = vadd.s32 %v43, 32
  %v106 = vadd.s32 %v50, 32
  %v107 = vadd.s32 %v57, 32
  %v108 = vadd.s32 %v64, 32
  %v109 = vadd.s32 %v71, 32
  %v110 = vadd.s32 %v78, 32
  %v111 = vsel %vm95, %v103, %v29
  %v112 = vsel %vm96, %v104, %v36
  %v113 = vsel %vm97, %v105, %v43
  %v114 = vsel %vm98, %v106, %v50
  %v115 = vsel %vm99, %v107, %v57
  %v116 = vsel %vm100, %v108, %v64
  %v117 = vsel %vm101, %v109, %v71
  %v118 = vsel %vm102, %v110, %v78
  %vm119 = vcmp.ge.s32.totalorder %v15, 64
  %vm120 = vcmp.ge.s32.totalorder %v16, 64
  %vm121 = vcmp.ge.s32.totalorder %v17, 64
  %vm122 = vcmp.ge.s32.totalorder %v18, 64
  %vm123 = vcmp.ge.s32.totalorder %v19, 64
  %vm124 = vcmp.ge.s32.totalorder %v20, 64
  %vm125 = vcmp.ge.s32.totalorder %v21, 64
  %vm126 = vcmp.ge.s32.totalorder %v22, 64
  %vm127 = vcmp.lt.s32.totalorder %v15, 960
  %vm128 = vcmp.lt.s32.totalorder %v16, 960
  %vm129 = vcmp.lt.s32.totalorder %v17, 960
  %vm130 = vcmp.lt.s32.totalorder %v18, 960
  %vm131 = vcmp.lt.s32.totalorder %v19, 960
  %vm132 = vcmp.lt.s32.totalorder %v20, 960
  %vm133 = vcmp.lt.s32.totalorder %v21, 960
  %vm134 = vcmp.lt.s32.totalorder %v22, 960
  %vm135 = vcmp.ge.s32.totalorder %v111, 2
  %vm136 = vcmp.ge.s32.totalorder %v112, 2
  %vm137 = vcmp.ge.s32.totalorder %v113, 2
  %vm138 = vcmp.ge.s32.totalorder %v114, 2
  %vm139 = vcmp.ge.s32.totalorder %v115, 2
  %vm140 = vcmp.ge.s32.totalorder %v116, 2
  %vm141 = vcmp.ge.s32.totalorder %v117, 2
  %vm142 = vcmp.ge.s32.totalorder %v118, 2
  %vm143 = vcmp.lt.s32.totalorder %v111, 30
  %vm144 = vcmp.lt.s32.totalorder %v112, 30
  %vm145 = vcmp.lt.s32.totalorder %v113, 30
  %vm146 = vcmp.lt.s32.totalorder %v114, 30
  %vm147 = vcmp.lt.s32.totalorder %v115, 30
  %vm148 = vcmp.lt.s32.totalorder %v116, 30
  %vm149 = vcmp.lt.s32.totalorder %v117, 30
  %vm150 = vcmp.lt.s32.totalorder %v118, 30
  %v151 = vld [vmem:[%s2] sm:$0xff]
  %v152 = vld [vmem:[%s0] sm:$0xff]
  %v153 = vld [vmem:[%s0 + $0x8] sm:$0xff]
  %v154 = vld [vmem:[%s0 + $0x10] sm:$0xff]
  %v155 = vld [vmem:[%s0 + $0x18] sm:$0xff]
  %v156 = vld [vmem:[%s0 + $0x20] sm:$0xff]
  %v157 = vld [vmem:[%s0 + $0x28] sm:$0xff]
  %v158 = vld [vmem:[%s0 + $0x30] sm:$0xff]
  %v159 = vld [vmem:[%s0 + $0x38] sm:$0xff]
  %160 = vrot.lane.b32.xlu0 %v152, 66
  %v161 = vpop.permute.xlu0 %160
  %162 = vrot.lane.b32.xlu0 %v153, 66
  %v163 = vpop.permute.xlu0 %162
  %164 = vrot.lane.b32.xlu0 %v154, 66
  %v165 = vpop.permute.xlu0 %164
  %166 = vrot.lane.b32.xlu0 %v155, 66
  %v167 = vpop.permute.xlu0 %166
  %168 = vrot.lane.b32.xlu0 %v156, 66
  %v169 = vpop.permute.xlu0 %168
  %170 = vrot.lane.b32.xlu0 %v157, 66
  %v171 = vpop.permute.xlu0 %170
  %172 = vrot.lane.b32.xlu0 %v158, 66
  %v173 = vpop.permute.xlu0 %172
  %174 = vrot.lane.b32.xlu0 %v159, 66
  %v175 = vpop.permute.xlu0 %174
  %vm176 = vcmp.lt.s32.totalorder %v15, 66
  %v177 = vsel %vm176, %v173, %v175
  %v178 = vsel %vm176, %v171, %v173
  %v179 = vsel %vm176, %v169, %v171
  %v180 = vsel %vm176, %v167, %v169
  %v181 = vsel %vm176, %v165, %v167
  %v182 = vsel %vm176, %v163, %v165
  %v183 = vsel %vm176, %v161, %v163
  %v184 = vsel %vm176, %v175, %v161
  %v185 = vld [vmem:[%s1] sm:$0xff]
  %v186 = vmul.f32 %v185, %v184
  %v187 = vmul.f32 %v185, %v183
  %v188 = vmul.f32 %v185, %v182
  %v189 = vmul.f32 %v185, %v181
  %v190 = vmul.f32 %v185, %v180
  %v191 = vmul.f32 %v185, %v179
  %v192 = vmul.f32 %v185, %v178
  %v193 = vmul.f32 %v185, %v177
  %vm194 = vmand %vm119, %vm135
  %vm195 = vmand %vm120, %vm136
  %vm196 = vmand %vm121, %vm137
  %vm197 = vmand %vm122, %vm138
  %vm198 = vmand %vm123, %vm139
  %vm199 = vmand %vm124, %vm140
  %vm200 = vmand %vm125, %vm141
  %vm201 = vmand %vm126, %vm142
  %v202 = vsel %vm194, %v186, 0.0
  %v203 = vsel %vm195, %v187, 0.0
  %v204 = vsel %vm196, %v188, 0.0
  %v205 = vsel %vm197, %v189, 0.0
  %v206 = vsel %vm198, %v190, 0.0
  %v207 = vsel %vm199, %v191, 0.0
  %v208 = vsel %vm200, %v192, 0.0
  %v209 = vsel %vm201, %v193, 0.0
  %v210 = vadd.f32 %v151, %v202
  %v211 = vadd.f32 %v151, %v203
  %v212 = vadd.f32 %v151, %v204
  %v213 = vadd.f32 %v151, %v205
  %v214 = vadd.f32 %v151, %v206
  %v215 = vadd.f32 %v151, %v207
  %v216 = vadd.f32 %v151, %v208
  %v217 = vadd.f32 %v151, %v209
  %218 = vrot.lane.b32.xlu0 %v152, 64
  %v219 = vpop.permute.xlu0 %218
  %220 = vrot.lane.b32.xlu0 %v153, 64
  %v221 = vpop.permute.xlu0 %220
  %222 = vrot.lane.b32.xlu0 %v154, 64
  %v223 = vpop.permute.xlu0 %222
  %224 = vrot.lane.b32.xlu0 %v155, 64
  %v225 = vpop.permute.xlu0 %224
  %226 = vrot.lane.b32.xlu0 %v156, 64
  %v227 = vpop.permute.xlu0 %226
  %228 = vrot.lane.b32.xlu0 %v157, 64
  %v229 = vpop.permute.xlu0 %228
  %230 = vrot.lane.b32.xlu0 %v158, 64
  %v231 = vpop.permute.xlu0 %230
  %232 = vrot.lane.b32.xlu0 %v159, 64
  %v233 = vpop.permute.xlu0 %232
  %vm234 = vcmp.lt.s32.totalorder %v15, 64
  %v235 = vsel %vm234, %v231, %v233
  %v236 = vsel %vm234, %v229, %v231
  %v237 = vsel %vm234, %v227, %v229
  %v238 = vsel %vm234, %v225, %v227
  %v239 = vsel %vm234, %v223, %v225
  %v240 = vsel %vm234, %v221, %v223
  %v241 = vsel %vm234, %v219, %v221
  %v242 = vsel %vm234, %v233, %v219
  %s243 = scalar_lea.vmem %s1, 8
  %v244 = vld [vmem:[%s243] sm:$0xff]
  %v245 = vmul.f32 %v244, %v242
  %v246 = vmul.f32 %v244, %v241
  %v247 = vmul.f32 %v244, %v240
  %v248 = vmul.f32 %v244, %v239
  %v249 = vmul.f32 %v244, %v238
  %v250 = vmul.f32 %v244, %v237
  %v251 = vmul.f32 %v244, %v236
  %v252 = vmul.f32 %v244, %v235
  %v253 = vsel %vm119, %v245, 0.0
  %v254 = vsel %vm120, %v246, 0.0
  %v255 = vsel %vm121, %v247, 0.0
  %v256 = vsel %vm122, %v248, 0.0
  %v257 = vsel %vm123, %v249, 0.0
  %v258 = vsel %vm124, %v250, 0.0
  %v259 = vsel %vm125, %v251, 0.0
  %v260 = vsel %vm126, %v252, 0.0
  %v261 = vadd.f32 %v210, %v253
  %v262 = vadd.f32 %v211, %v254
  %v263 = vadd.f32 %v212, %v255
  %v264 = vadd.f32 %v213, %v256
  %v265 = vadd.f32 %v214, %v257
  %v266 = vadd.f32 %v215, %v258
  %v267 = vadd.f32 %v216, %v259
  %v268 = vadd.f32 %v217, %v260
  %269 = vrot.lane.b32.xlu0 %v152, 62
  %v270 = vpop.permute.xlu0 %269
  %271 = vrot.lane.b32.xlu0 %v153, 62
  %v272 = vpop.permute.xlu0 %271
  %273 = vrot.lane.b32.xlu0 %v154, 62
  %v274 = vpop.permute.xlu0 %273
  %275 = vrot.lane.b32.xlu0 %v155, 62
  %v276 = vpop.permute.xlu0 %275
  %277 = vrot.lane.b32.xlu0 %v156, 62
  %v278 = vpop.permute.xlu0 %277
  %279 = vrot.lane.b32.xlu0 %v157, 62
  %v280 = vpop.permute.xlu0 %279
  %281 = vrot.lane.b32.xlu0 %v158, 62
  %v282 = vpop.permute.xlu0 %281
  %283 = vrot.lane.b32.xlu0 %v159, 62
  %v284 = vpop.permute.xlu0 %283
  %vm285 = vcmp.lt.s32.totalorder %v15, 62
  %v286 = vsel %vm285, %v282, %v284
  %v287 = vsel %vm285, %v280, %v282
  %v288 = vsel %vm285, %v278, %v280
  %v289 = vsel %vm285, %v276, %v278
  %v290 = vsel %vm285, %v274, %v276
  %v291 = vsel %vm285, %v272, %v274
  %v292 = vsel %vm285, %v270, %v272
  %v293 = vsel %vm285, %v284, %v270
  %s294 = scalar_lea.vmem %s1, 16
  %v295 = vld [vmem:[%s294] sm:$0xff]
  %v296 = vmul.f32 %v295, %v293
  %v297 = vmul.f32 %v295, %v292
  %v298 = vmul.f32 %v295, %v291
  %v299 = vmul.f32 %v295, %v290
  %v300 = vmul.f32 %v295, %v289
  %v301 = vmul.f32 %v295, %v288
  %v302 = vmul.f32 %v295, %v287
  %v303 = vmul.f32 %v295, %v286
  %vm304 = vmand %vm119, %vm143
  %vm305 = vmand %vm120, %vm144
  %vm306 = vmand %vm121, %vm145
  %vm307 = vmand %vm122, %vm146
  %vm308 = vmand %vm123, %vm147
  %vm309 = vmand %vm124, %vm148
  %vm310 = vmand %vm125, %vm149
  %vm311 = vmand %vm126, %vm150
  %v312 = vsel %vm304, %v296, 0.0
  %v313 = vsel %vm305, %v297, 0.0
  %v314 = vsel %vm306, %v298, 0.0
  %v315 = vsel %vm307, %v299, 0.0
  %v316 = vsel %vm308, %v300, 0.0
  %v317 = vsel %vm309, %v301, 0.0
  %v318 = vsel %vm310, %v302, 0.0
  %v319 = vsel %vm311, %v303, 0.0
  %v320 = vadd.f32 %v261, %v312
  %v321 = vadd.f32 %v262, %v313
  %v322 = vadd.f32 %v263, %v314
  %v323 = vadd.f32 %v264, %v315
  %v324 = vadd.f32 %v265, %v316
  %v325 = vadd.f32 %v266, %v317
  %v326 = vadd.f32 %v267, %v318
  %v327 = vadd.f32 %v268, %v319
  %328 = vrot.lane.b32.xlu0 %v152, 2
  %v329 = vpop.permute.xlu0 %328
  %330 = vrot.lane.b32.xlu0 %v153, 2
  %v331 = vpop.permute.xlu0 %330
  %332 = vrot.lane.b32.xlu0 %v154, 2
  %v333 = vpop.permute.xlu0 %332
  %334 = vrot.lane.b32.xlu0 %v155, 2
  %v335 = vpop.permute.xlu0 %334
  %336 = vrot.lane.b32.xlu0 %v156, 2
  %v337 = vpop.permute.xlu0 %336
  %338 = vrot.lane.b32.xlu0 %v157, 2
  %v339 = vpop.permute.xlu0 %338
  %340 = vrot.lane.b32.xlu0 %v158, 2
  %v341 = vpop.permute.xlu0 %340
  %342 = vrot.lane.b32.xlu0 %v159, 2
  %v343 = vpop.permute.xlu0 %342
  %vm344 = vcmp.lt.s32.totalorder %v15, 2
  %v345 = vsel %vm344, %v341, %v343
  %v346 = vsel %vm344, %v339, %v341
  %v347 = vsel %vm344, %v337, %v339
  %v348 = vsel %vm344, %v335, %v337
  %v349 = vsel %vm344, %v333, %v335
  %v350 = vsel %vm344, %v331, %v333
  %v351 = vsel %vm344, %v329, %v331
  %v352 = vsel %vm344, %v343, %v329
  %s353 = scalar_lea.vmem %s1, 24
  %v354 = vld [vmem:[%s353] sm:$0xff]
  %v355 = vmul.f32 %v354, %v352
  %v356 = vmul.f32 %v354, %v351
  %v357 = vmul.f32 %v354, %v350
  %v358 = vmul.f32 %v354, %v349
  %v359 = vmul.f32 %v354, %v348
  %v360 = vmul.f32 %v354, %v347
  %v361 = vmul.f32 %v354, %v346
  %v362 = vmul.f32 %v354, %v345
  %v363 = vsel %vm135, %v355, 0.0
  %v364 = vsel %vm136, %v356, 0.0
  %v365 = vsel %vm137, %v357, 0.0
  %v366 = vsel %vm138, %v358, 0.0
  %v367 = vsel %vm139, %v359, 0.0
  %v368 = vsel %vm140, %v360, 0.0
  %v369 = vsel %vm141, %v361, 0.0
  %v370 = vsel %vm142, %v362, 0.0
  %v371 = vadd.f32 %v320, %v363
  %v372 = vadd.f32 %v321, %v364
  %v373 = vadd.f32 %v322, %v365
  %v374 = vadd.f32 %v323, %v366
  %v375 = vadd.f32 %v324, %v367
  %v376 = vadd.f32 %v325, %v368
  %v377 = vadd.f32 %v326, %v369
  %v378 = vadd.f32 %v327, %v370
  %s379 = scalar_lea.vmem %s1, 32
  %v380 = vld [vmem:[%s379] sm:$0xff]
  %v381 = vmul.f32 %v380, %v152
  %v382 = vmul.f32 %v380, %v153
  %v383 = vmul.f32 %v380, %v154
  %v384 = vmul.f32 %v380, %v155
  %v385 = vmul.f32 %v380, %v156
  %v386 = vmul.f32 %v380, %v157
  %v387 = vmul.f32 %v380, %v158
  %v388 = vmul.f32 %v380, %v159
  %v389 = vadd.f32 %v371, %v381
  %v390 = vadd.f32 %v372, %v382
  %v391 = vadd.f32 %v373, %v383
  %v392 = vadd.f32 %v374, %v384
  %v393 = vadd.f32 %v375, %v385
  %v394 = vadd.f32 %v376, %v386
  %v395 = vadd.f32 %v377, %v387
  %v396 = vadd.f32 %v378, %v388
  %397 = vrot.lane.b32.xlu0 %v152, 126
  %v398 = vpop.permute.xlu0 %397
  %399 = vrot.lane.b32.xlu0 %v153, 126
  %v400 = vpop.permute.xlu0 %399
  %401 = vrot.lane.b32.xlu0 %v154, 126
  %v402 = vpop.permute.xlu0 %401
  %403 = vrot.lane.b32.xlu0 %v155, 126
  %v404 = vpop.permute.xlu0 %403
  %405 = vrot.lane.b32.xlu0 %v156, 126
  %v406 = vpop.permute.xlu0 %405
  %407 = vrot.lane.b32.xlu0 %v157, 126
  %v408 = vpop.permute.xlu0 %407
  %409 = vrot.lane.b32.xlu0 %v158, 126
  %v410 = vpop.permute.xlu0 %409
  %411 = vrot.lane.b32.xlu0 %v159, 126
  %v412 = vpop.permute.xlu0 %411
  %vm413 = vcmp.lt.s32.totalorder %v15, 126
  %v414 = vsel %vm413, %v410, %v412
  %v415 = vsel %vm413, %v408, %v410
  %v416 = vsel %vm413, %v406, %v408
  %v417 = vsel %vm413, %v404, %v406
  %v418 = vsel %vm413, %v402, %v404
  %v419 = vsel %vm413, %v400, %v402
  %v420 = vsel %vm413, %v398, %v400
  %v421 = vsel %vm413, %v412, %v398
  %s422 = scalar_lea.vmem %s1, 40
  %v423 = vld [vmem:[%s422] sm:$0xff]
  %v424 = vmul.f32 %v423, %v420
  %v425 = vmul.f32 %v423, %v419
  %v426 = vmul.f32 %v423, %v418
  %v427 = vmul.f32 %v423, %v417
  %v428 = vmul.f32 %v423, %v416
  %v429 = vmul.f32 %v423, %v415
  %v430 = vmul.f32 %v423, %v414
  %v431 = vmul.f32 %v423, %v421
  %v432 = vsel %vm143, %v424, 0.0
  %v433 = vsel %vm144, %v425, 0.0
  %v434 = vsel %vm145, %v426, 0.0
  %v435 = vsel %vm146, %v427, 0.0
  %v436 = vsel %vm147, %v428, 0.0
  %v437 = vsel %vm148, %v429, 0.0
  %v438 = vsel %vm149, %v430, 0.0
  %v439 = vsel %vm150, %v431, 0.0
  %v440 = vadd.f32 %v389, %v432
  %v441 = vadd.f32 %v390, %v433
  %v442 = vadd.f32 %v391, %v434
  %v443 = vadd.f32 %v392, %v435
  %v444 = vadd.f32 %v393, %v436
  %v445 = vadd.f32 %v394, %v437
  %v446 = vadd.f32 %v395, %v438
  %v447 = vadd.f32 %v396, %v439
  %s448 = scalar_lea.vmem %s1, 48
  %v449 = vld [vmem:[%s448] sm:$0xff]
  %v450 = vmul.f32 %v449, %v183
  %v451 = vmul.f32 %v449, %v182
  %v452 = vmul.f32 %v449, %v181
  %v453 = vmul.f32 %v449, %v180
  %v454 = vmul.f32 %v449, %v179
  %v455 = vmul.f32 %v449, %v178
  %v456 = vmul.f32 %v449, %v177
  %v457 = vmul.f32 %v449, %v184
  %vm458 = vmand %vm127, %vm135
  %vm459 = vmand %vm128, %vm136
  %vm460 = vmand %vm129, %vm137
  %vm461 = vmand %vm130, %vm138
  %vm462 = vmand %vm131, %vm139
  %vm463 = vmand %vm132, %vm140
  %vm464 = vmand %vm133, %vm141
  %vm465 = vmand %vm134, %vm142
  %v466 = vsel %vm458, %v450, 0.0
  %v467 = vsel %vm459, %v451, 0.0
  %v468 = vsel %vm460, %v452, 0.0
  %v469 = vsel %vm461, %v453, 0.0
  %v470 = vsel %vm462, %v454, 0.0
  %v471 = vsel %vm463, %v455, 0.0
  %v472 = vsel %vm464, %v456, 0.0
  %v473 = vsel %vm465, %v457, 0.0
  %v474 = vadd.f32 %v440, %v466
  %v475 = vadd.f32 %v441, %v467
  %v476 = vadd.f32 %v442, %v468
  %v477 = vadd.f32 %v443, %v469
  %v478 = vadd.f32 %v444, %v470
  %v479 = vadd.f32 %v445, %v471
  %v480 = vadd.f32 %v446, %v472
  %v481 = vadd.f32 %v447, %v473
  %s482 = scalar_lea.vmem %s1, 56
  %v483 = vld [vmem:[%s482] sm:$0xff]
  %v484 = vmul.f32 %v483, %v241
  %v485 = vmul.f32 %v483, %v240
  %v486 = vmul.f32 %v483, %v239
  %v487 = vmul.f32 %v483, %v238
  %v488 = vmul.f32 %v483, %v237
  %v489 = vmul.f32 %v483, %v236
  %v490 = vmul.f32 %v483, %v235
  %v491 = vmul.f32 %v483, %v242
  %v492 = vsel %vm127, %v484, 0.0
  %v493 = vsel %vm128, %v485, 0.0
  %v494 = vsel %vm129, %v486, 0.0
  %v495 = vsel %vm130, %v487, 0.0
  %v496 = vsel %vm131, %v488, 0.0
  %v497 = vsel %vm132, %v489, 0.0
  %v498 = vsel %vm133, %v490, 0.0
  %v499 = vsel %vm134, %v491, 0.0
  %v500 = vadd.f32 %v474, %v492
  %v501 = vadd.f32 %v475, %v493
  %v502 = vadd.f32 %v476, %v494
  %v503 = vadd.f32 %v477, %v495
  %v504 = vadd.f32 %v478, %v496
  %v505 = vadd.f32 %v479, %v497
  %v506 = vadd.f32 %v480, %v498
  %v507 = vadd.f32 %v481, %v499
  %s508 = scalar_lea.vmem %s1, 64
  %v509 = vld [vmem:[%s508] sm:$0xff]
  %v510 = vmul.f32 %v509, %v292
  %v511 = vmul.f32 %v509, %v291
  %v512 = vmul.f32 %v509, %v290
  %v513 = vmul.f32 %v509, %v289
  %v514 = vmul.f32 %v509, %v288
  %v515 = vmul.f32 %v509, %v287
  %v516 = vmul.f32 %v509, %v286
  %v517 = vmul.f32 %v509, %v293
  %vm518 = vmand %vm127, %vm143
  %vm519 = vmand %vm128, %vm144
  %vm520 = vmand %vm129, %vm145
  %vm521 = vmand %vm130, %vm146
  %vm522 = vmand %vm131, %vm147
  %vm523 = vmand %vm132, %vm148
  %vm524 = vmand %vm133, %vm149
  %vm525 = vmand %vm134, %vm150
  %v526 = vsel %vm518, %v510, 0.0
  %v527 = vsel %vm519, %v511, 0.0
  %v528 = vsel %vm520, %v512, 0.0
  %v529 = vsel %vm521, %v513, 0.0
  %v530 = vsel %vm522, %v514, 0.0
  %v531 = vsel %vm523, %v515, 0.0
  %v532 = vsel %vm524, %v516, 0.0
  %v533 = vsel %vm525, %v517, 0.0
  %v534 = vadd.f32 %v500, %v526
  %v535 = vadd.f32 %v501, %v527
  %v536 = vadd.f32 %v502, %v528
  %v537 = vadd.f32 %v503, %v529
  %v538 = vadd.f32 %v504, %v530
  %v539 = vadd.f32 %v505, %v531
  %v540 = vadd.f32 %v506, %v532
  %v541 = vadd.f32 %v507, %v533
  %vm542 = vcmp.gt.f32.partialorder %v534, 0.0
  %vm543 = vcmp.gt.f32.partialorder %v535, 0.0
  %vm544 = vcmp.gt.f32.partialorder %v536, 0.0
  %vm545 = vcmp.gt.f32.partialorder %v537, 0.0
  %vm546 = vcmp.gt.f32.partialorder %v538, 0.0
  %vm547 = vcmp.gt.f32.partialorder %v539, 0.0
  %vm548 = vcmp.gt.f32.partialorder %v540, 0.0
  %vm549 = vcmp.gt.f32.partialorder %v541, 0.0
  %v550 = vmul.f32 %v534, 0.01
  %v551 = vmul.f32 %v535, 0.01
  %v552 = vmul.f32 %v536, 0.01
  %v553 = vmul.f32 %v537, 0.01
  %v554 = vmul.f32 %v538, 0.01
  %v555 = vmul.f32 %v539, 0.01
  %v556 = vmul.f32 %v540, 0.01
  %v557 = vmul.f32 %v541, 0.01
  %v558 = vsel %vm542, %v534, %v550
  %v559 = vsel %vm543, %v535, %v551
  %v560 = vsel %vm544, %v536, %v552
  %v561 = vsel %vm545, %v537, %v553
  %v562 = vsel %vm546, %v538, %v554
  %v563 = vsel %vm547, %v539, %v555
  %v564 = vsel %vm548, %v540, %v556
  %v565 = vsel %vm549, %v541, %v557
  %566 = vst [vmem:[%s3] sm:$0xff] %v558
  %567 = vst [vmem:[%s3 + $0x8] sm:$0xff] %v559
  %568 = vst [vmem:[%s3 + $0x10] sm:$0xff] %v560
  %569 = vst [vmem:[%s3 + $0x18] sm:$0xff] %v561
  %570 = vst [vmem:[%s3 + $0x20] sm:$0xff] %v562
  %571 = vst [vmem:[%s3 + $0x28] sm:$0xff] %v563
  %572 = vst [vmem:[%s3 + $0x30] sm:$0xff] %v564
  %573 = vst [vmem:[%s3 + $0x38] sm:$0xff] %v565
  // Predicated region
  $region14: #{_lambda_.1} parent=0 // pred_check
    _
  $region15: #{_lambda_.1} parent=0 // pred_check_branch
    %575 = sbr.rel (0) target = $region17
  $region16: #{_lambda_.1} parent=0 // pred_region
    _
  $region17: #{_lambda_.1} parent=0 // pred_fallthru
    _
  // Predicated region
  $region18: #{_lambda_.1} parent=0 // pred_check
    _
  $region19: #{_lambda_.1} parent=0 // pred_check_branch
    %577 = sbr.rel (0) target = $region21
  $region20: #{_lambda_.1} parent=0 // pred_region
    _
  $region21: #{_lambda_.1} parent=0 // pred_fallthru
    _

</llo_original>
